<compile_context>
chip_gen: v7x
topology: tpu7x:2x2x1
jax: 0.10.0
libtpu: 0.0.40
codegen_flags: <defaults>
</compile_context>

<pallas_src>
import functools
import math

import numpy as np
import jax
import jax.numpy as jnp
from jax.experimental import pallas as pl
from jax.experimental.pallas import tpu as pltpu

# -------------------- static configuration (deterministic) --------------------
S2_FULL_BANDS = ['B01', 'B02_BLUE', 'B03_GREEN', 'B04_RED', 'B05_RE1', 'B06_RE2',
                 'B07_RE3', 'B08_NIR1', 'B8A_NIR2', 'B09_WV', 'B10', 'B11_SWI1',
                 'B12_SWI2']
BANDS_INDEX = [i for i in range(len(S2_FULL_BANDS))
               if S2_FULL_BANDS[i] not in ['B01', 'B10']]        # 11 kept bands
SD = 500.0

# z_phy_ranges (normally loaded from rtm_paras.json) — defined in-script.
Z_PHY_RANGES = {
    "N":    {"min": 1.0,   "max": 3.0},
    "cab":  {"min": 10.0,  "max": 80.0},
    "cw":   {"min": 0.001, "max": 0.05},
    "cm":   {"min": 0.005, "max": 0.05},
    "LAI":  {"min": 0.01,  "max": 10.0},
    "LAIu": {"min": 0.01,  "max": 3.0},
    "fc":   {"min": 0.1,   "max": 1.0},
}
PARAM_NAMES = list(Z_PHY_RANGES.keys())
P = len(PARAM_NAMES)                      # 7 physical parameters from the encoder
FC_IDX = PARAM_NAMES.index("fc")
FC_MIN = float(Z_PHY_RANGES["fc"]["min"])
FC_SCALE = float(Z_PHY_RANGES["fc"]["max"] - Z_PHY_RANGES["fc"]["min"])
N_BANDS_FULL = len(S2_FULL_BANDS)         # 13
N_BANDS_OUT = len(BANDS_INDEX)            # 11
NC = P + 3                                # folded constants: [wz (P) | wcd | wh | bias]


# ------------------------------- Pallas kernel --------------------------------
def _physics_rtm_kernel(zt_ref, c_ref, out_ref, *, use_bf16_dot: bool):
    # zt_ref:  (P, TB)      encoder output block in [0,1], batch on the lane axis
    # c_ref:   (11, P+3)    merged per-band constants: cols [0:P]=folded weights,
    #                       [P]=w_cd/x_scale, [P+1]=w_h/x_scale, [P+2]=folded bias
    # out_ref: (11, TB)     standardized 11-band output block (batch on lanes)
    z = zt_ref[...]                                              # (P, TB)
    zf = z.astype(jnp.float32)

    # Nonlinear fc -> cd -> h path (range constants are baked Python floats; all
    # linear rescales are folded into the constants operand wrapper-side).
    fc = zf[FC_IDX:FC_IDX + 1, :] * FC_SCALE + FC_MIN            # (1, TB)
    fc = jnp.maximum(fc, 1e-6)          # guard garbage lanes of a partial block
    cd = jnp.sqrt(fc * (10000.0 / (math.pi * SD))) * 2.0         # (1, TB)
    h = jnp.exp(2.117 + 0.507 * jnp.log(cd))                     # (1, TB)

    wz = c_ref[:, :P]                                            # (11, P)
    wcd = c_ref[:, P:P + 1]                                      # (11, 1)
    wh = c_ref[:, P + 1:P + 2]                                   # (11, 1)
    bias = c_ref[:, P + 2:P + 3]                                 # (11, 1)

    # Surrogate RTM + folded rescale/band-select/standardization in one tiny
    # contraction.  bf16 keeps the (11,7)x(7,TB) dot on the native MXU path so
    # HBM bandwidth stays the only limiter; accumulation is f32 either way.
    if use_bf16_dot:
        acc = jnp.dot(wz.astype(jnp.bfloat16), z.astype(jnp.bfloat16),
                      preferred_element_type=jnp.float32)        # (11, TB)
    else:
        acc = jnp.dot(wz, zf, preferred_element_type=jnp.float32)

    # cd/h/bias contributions in f32: (11,1)*(1,TB) broadcasts, lane-dense FMAs.
    acc = acc + wcd * cd + wh * h + bias
    out_ref[...] = acc.astype(out_ref.dtype)                     # full-width store


# --------------------------- wrapper-side constant folding --------------------
def _fold_constants(w, w_cd, w_h, bias, x_mean, x_scale):
    """Fold rescale + band selection + standardization into one (11, P+3) array."""
    sel = jnp.asarray(BANDS_INDEX, dtype=jnp.int32)
    r_min = jnp.array([Z_PHY_RANGES[n]["min"] for n in PARAM_NAMES],
                      dtype=jnp.float32)                                   # (P,)
    r_scale = jnp.array([Z_PHY_RANGES[n]["max"] - Z_PHY_RANGES[n]["min"]
                         for n in PARAM_NAMES], dtype=jnp.float32)         # (P,)
    inv_xs = 1.0 / x_scale                                                 # (1, 11)
    w_sel = w[:, sel]                                                      # (P, 11)
    wz = ((r_scale[:, None] * w_sel) * inv_xs).T                           # (11, P)
    wcd_col = (w_cd[:, sel] * inv_xs).T                                    # (11, 1)
    wh_col = (w_h[:, sel] * inv_xs).T                                      # (11, 1)
    bias_col = ((r_min[None, :] @ w_sel + bias[:, sel] - x_mean)
                * inv_xs).T                                                # (11, 1)
    return jnp.concatenate([wz, wcd_col, wh_col, bias_col], axis=1)        # (11, P+3)


# ------------------------------- tile selection --------------------------------
def _round_up(x, m):
    return ((x + m - 1) // m) * m


def _default_tile(B):
    """Lane tile: as large as double-buffered VMEM allows; >=2 steps on v7x."""
    b128 = _round_up(max(B, 1), 128)
    cap = 32768          # 2*(8+16)*tb*4 B ≈ 6.3 MiB double-buffered: fits v5e's
    min_steps = 1        # 16 MiB default scoped VMEM and amortizes step overhead
    try:
        kind = jax.devices()[0].device_kind.lower()
        if "7" in kind:  # v7x-class: 2 TensorCores/chip, ~3.2 TB/s HBM
            cap = 65536  # ≈12.6 MiB double-buffered, under the 32 MiB default
            min_steps = 2
    except Exception:
        pass
    tb = min(cap, b128)
    if min_steps > 1 and b128 > 128 * min_steps:
        # keep >=2 grid steps so dimension_semantics=("parallel",) shards
        # the batch across both TensorCores
        tb = min(tb, _round_up(pl.cdiv(b128, min_steps), 128))
    return tb


# ------------------------------- core entry point -------------------------------
def physics_rtm_band_major(z_t, w, w_cd, w_h, bias, x_mean, x_scale, *,
                           tile=None, out_dtype=jnp.float32, dot_in_bf16=True):
    """Band-major Physics_RTM: z_t (P, B) in [0,1] -> (11, B) standardized bands.

    Preferred entry point: no layout transposes and no padding copies — the
    encoder should emit z already batch-on-lanes and the consumer should accept
    band-major output.
    """
    if z_t.shape[0] != P:
        raise ValueError(f"z_t must have shape ({P}, B), got {z_t.shape}")
    B = z_t.shape[1]
    consts = _fold_constants(w, w_cd, w_h, bias, x_mean, x_scale)   # (11, P+3)

    tb = _round_up(int(tile), 128) if tile is not None else _default_tile(B)
    grid = (pl.cdiv(B, tb),)       # ragged last block handled by Pallas (no pad)

    kernel = functools.partial(_physics_rtm_kernel, use_bf16_dot=dot_in_bf16)
    out_bytes = jnp.dtype(out_dtype).itemsize

    return pl.pallas_call(
        kernel,
        out_shape=jax.ShapeDtypeStruct((N_BANDS_OUT, B), out_dtype),
        grid_spec=pltpu.PrefetchScalarGridSpec(
            num_scalar_prefetch=0,
            grid=grid,
            in_specs=[
                pl.BlockSpec((P, tb), lambda i: (0, i)),            # z^T block
                pl.BlockSpec((N_BANDS_OUT, NC), lambda i: (0, 0)),  # merged consts
            ],
            out_specs=pl.BlockSpec((N_BANDS_OUT, tb), lambda i: (0, i)),
        ),
        compiler_params=pltpu.CompilerParams(
            dimension_semantics=("parallel",)),
        cost_estimate=pl.CostEstimate(
            flops=2 * B * (P + 3) * N_BANDS_OUT,
            transcendentals=3 * B,
            bytes_accessed=z_t.dtype.itemsize * B * P
                           + out_bytes * B * N_BANDS_OUT
                           + 4 * N_BANDS_OUT * NC),
    )(z_t, consts)


# --------------------- spec-layout adapter (PyTorch contract) -------------------
def physics_rtm(z_phy, w, w_cd, w_h, bias, x_mean, x_scale, **kwargs):
    """(B, P) -> (B, 11), matching the PyTorch module's layout.

    This adapter adds two small layout transposes around the band-major core;
    prefer `physics_rtm_band_major` in fused pipelines to avoid them entirely.
    """
    return physics_rtm_band_major(z_phy.T, w, w_cd, w_h, bias,
                                  x_mean, x_scale, **kwargs).T


# ------------------------------ reference (jnp) ---------------------------------
def physics_rtm_ref(z_phy, w, w_cd, w_h, bias, x_mean, x_scale):
    r_min = jnp.array([[Z_PHY_RANGES[n]["min"] for n in PARAM_NAMES]],
                      dtype=jnp.float32)
    r_scale = jnp.array([[Z_PHY_RANGES[n]["max"] - Z_PHY_RANGES[n]["min"]
                          for n in PARAM_NAMES]], dtype=jnp.float32)
    resc = z_phy * r_scale + r_min
    fc = resc[:, FC_IDX:FC_IDX + 1]
    cd = jnp.sqrt(fc * 10000.0 / (jnp.pi * SD)) * 2.0
    h = jnp.exp(2.117 + 0.507 * jnp.log(cd))
    out13 = resc @ w + cd * w_cd + h * w_h + bias
    sel = out13[:, jnp.array(BANDS_INDEX)]
    return (sel - x_mean) / x_scale


if __name__ == "__main__":
    key = jax.random.PRNGKey(0)
    k_z1, k_w, k_wcd, k_wh, k_b, k_m, k_s, k_z2 = jax.random.split(key, 8)

    # deterministic surrogate-RTM parameters
    w = 0.1 * jax.random.normal(k_w, (P, N_BANDS_FULL), dtype=jnp.float32)
    w_cd = 0.1 * jax.random.normal(k_wcd, (1, N_BANDS_FULL), dtype=jnp.float32)
    w_h = 0.1 * jax.random.normal(k_wh, (1, N_BANDS_FULL), dtype=jnp.float32)
    bias = 0.1 * jax.random.normal(k_b, (1, N_BANDS_FULL), dtype=jnp.float32)

    # standardization constants (restricted to the 11 kept bands)
    x_mean = jax.random.normal(k_m, (1, N_BANDS_OUT), dtype=jnp.float32)
    x_scale = jnp.abs(jax.random.normal(k_s, (1, N_BANDS_OUT),
                                        dtype=jnp.float32)) + 0.5

    # 1) exact-f32 path, tiny batch (single partial lane block), band-major I/O
    B1 = 8
    zt1 = jax.random.uniform(k_z1, (P, B1), dtype=jnp.float32)
    out1 = jax.block_until_ready(
        physics_rtm_band_major(zt1, w, w_cd, w_h, bias, x_mean, x_scale,
                               dot_in_bf16=False))
    ref1 = np.asarray(physics_rtm_ref(zt1.T, w, w_cd, w_h, bias,
                                      x_mean, x_scale)).T
    np.testing.assert_allclose(np.asarray(out1), ref1, rtol=1e-4, atol=1e-4)

    # 2) exact-f32 path, ragged multi-step grid (B=300, tile=256 -> partial tail)
    B2 = 300
    zt2 = jax.random.uniform(k_z2, (P, B2), dtype=jnp.float32)
    ref2 = np.asarray(physics_rtm_ref(zt2.T, w, w_cd, w_h, bias,
                                      x_mean, x_scale)).T
    out2_f32 = jax.block_until_ready(
        physics_rtm_band_major(zt2, w, w_cd, w_h, bias, x_mean, x_scale,
                               tile=256, dot_in_bf16=False))
    np.testing.assert_allclose(np.asarray(out2_f32), ref2, rtol=1e-4, atol=1e-4)

    # 3) default bf16-dot (HBM-bound) path: ~3 significant digits vs exact math,
    #    checked as a fraction of the output dynamic range.
    out2_bf16 = jax.block_until_ready(
        physics_rtm_band_major(zt2, w, w_cd, w_h, bias, x_mean, x_scale,
                               tile=256))
    err = float(np.max(np.abs(np.asarray(out2_bf16) - ref2)))
    scale = float(np.max(np.abs(ref2)))
    assert err <= 3e-2 * scale + 1e-3, f"bf16-dot error {err} vs scale {scale}"

    # 4) spec-layout adapter, matching the PyTorch (B, P) -> (B, 11) contract
    out4 = jax.block_until_ready(
        physics_rtm(zt1.T, w, w_cd, w_h, bias, x_mean, x_scale,
                    dot_in_bf16=False))
    np.testing.assert_allclose(np.asarray(out4), ref1.T, rtol=1e-4, atol=1e-4)

    print("KERNEL_OK")
</pallas_src>

<mosaic_0001>
module attributes {stable_mosaic.version = 11 : i64} {
  func.func @_physics_rtm_kernel(%arg0: i32, %arg1: memref<7x128xf32, #tpu.memory_space<vmem>>, %arg2: memref<11x10xf32, #tpu.memory_space<vmem>>, %arg3: memref<11x128xf32, #tpu.memory_space<vmem>>) attributes {dimension_semantics = [#tpu.dimension_semantics<parallel>], iteration_bounds = array<i64: 1>, scalar_prefetch = 0 : i64, scratch_operands = 0 : i64, tpu.core_type = #tpu.core_type<tc>, window_params = [{transform_indices = @transform_0, window_bounds = array<i64: 7, 128>}, {pipeline_mode = #tpu.pipeline_mode<synchronous>, transform_indices = @transform_1, window_bounds = array<i64: 11, 10>}, {transform_indices = @transform_2, window_bounds = array<i64: 11, 128>}]} {
    %c0 = arith.constant 0 : index
    %c0_0 = arith.constant 0 : index
    %0 = vector.load %arg1[%c0, %c0_0] : memref<7x128xf32, #tpu.memory_space<vmem>>, vector<7x128xf32>
    %1 = vector.extract_strided_slice %0 {offsets = [6, 0], sizes = [1, 128], strides = [1, 1]} : vector<7x128xf32> to vector<1x128xf32>
    %cst = arith.constant 0.899999976 : f32
    %2 = vector.broadcast %cst : f32 to vector<1x128xf32>
    %3 = arith.mulf %1, %2 : vector<1x128xf32>
    %cst_1 = arith.constant 1.000000e-01 : f32
    %4 = vector.broadcast %cst_1 : f32 to vector<1x128xf32>
    %5 = arith.addf %3, %4 : vector<1x128xf32>
    %cst_2 = arith.constant 9.99999997E-7 : f32
    %6 = vector.broadcast %cst_2 : f32 to vector<1x128xf32>
    %7 = arith.maximumf %5, %6 : vector<1x128xf32>
    %cst_3 = arith.constant 6.36619759 : f32
    %8 = vector.broadcast %cst_3 : f32 to vector<1x128xf32>
    %9 = arith.mulf %7, %8 : vector<1x128xf32>
    %10 = math.sqrt %9 : vector<1x128xf32>
    %cst_4 = arith.constant 2.000000e+00 : f32
    %11 = vector.broadcast %cst_4 : f32 to vector<1x128xf32>
    %12 = arith.mulf %10, %11 : vector<1x128xf32>
    %13 = math.log %12 : vector<1x128xf32>
    %cst_5 = arith.constant 5.070000e-01 : f32
    %14 = vector.broadcast %cst_5 : f32 to vector<1x128xf32>
    %15 = arith.mulf %14, %13 : vector<1x128xf32>
    %cst_6 = arith.constant 2.117000e+00 : f32
    %16 = vector.broadcast %cst_6 : f32 to vector<1x128xf32>
    %17 = arith.addf %16, %15 : vector<1x128xf32>
    %18 = math.exp %17 : vector<1x128xf32>
    %c0_7 = arith.constant 0 : index
    %c0_8 = arith.constant 0 : index
    %19 = vector.load %arg2[%c0_7, %c0_8] : memref<11x10xf32, #tpu.memory_space<vmem>>, vector<11x7xf32>
    %c0_9 = arith.constant 0 : index
    %c7 = arith.constant 7 : index
    %20 = vector.load %arg2[%c0_9, %c7] : memref<11x10xf32, #tpu.memory_space<vmem>>, vector<11x1xf32>
    %c0_10 = arith.constant 0 : index
    %c8 = arith.constant 8 : index
    %21 = vector.load %arg2[%c0_10, %c8] : memref<11x10xf32, #tpu.memory_space<vmem>>, vector<11x1xf32>
    %c0_11 = arith.constant 0 : index
    %c9 = arith.constant 9 : index
    %22 = vector.load %arg2[%c0_11, %c9] : memref<11x10xf32, #tpu.memory_space<vmem>>, vector<11x1xf32>
    %cst_12 = arith.constant dense<0.000000e+00> : vector<11x128xf32>
    %23 = tpu.matmul %19, %0, %cst_12 {dimension_numbers = #tpu.dot_dimension_numbers<[1], [0], [0], [1], [0, 0, 1, 1], [], []>} : vector<11x7xf32>, vector<7x128xf32>, vector<11x128xf32> -> vector<11x128xf32>
    %24 = vector.broadcast %20 : vector<11x1xf32> to vector<11x128xf32>
    %25 = vector.broadcast %12 : vector<1x128xf32> to vector<11x128xf32>
    %26 = arith.mulf %24, %25 : vector<11x128xf32>
    %27 = arith.addf %23, %26 : vector<11x128xf32>
    %28 = vector.broadcast %21 : vector<11x1xf32> to vector<11x128xf32>
    %29 = vector.broadcast %18 : vector<1x128xf32> to vector<11x128xf32>
    %30 = arith.mulf %28, %29 : vector<11x128xf32>
    %31 = arith.addf %27, %30 : vector<11x128xf32>
    %32 = vector.broadcast %22 : vector<11x1xf32> to vector<11x128xf32>
    %33 = arith.addf %31, %32 : vector<11x128xf32>
    %c0_13 = arith.constant 0 : index
    %c0_14 = arith.constant 0 : index
    %34 = vector.load %arg3[%c0_13, %c0_14] : memref<11x128xf32, #tpu.memory_space<vmem>>, vector<11x128xf32>
    tpu.vector_store %arg3[%c0_13, %c0_14], %33 {strides = array<i32>} : memref<11x128xf32, #tpu.memory_space<vmem>>, vector<11x128xf32>,
    return
  }
  func.func @transform_0(%arg0: i32) -> (i32, i32) {
    %c0_i32 = arith.constant 0 : i32
    %c0_i32_0 = arith.constant 0 : i32
    return %c0_i32, %arg0 : i32, i32
  }
  func.func @transform_1(%arg0: i32) -> (i32, i32) {
    %c0_i32 = arith.constant 0 : i32
    %c0_i32_0 = arith.constant 0 : i32
    %c0_i32_1 = arith.constant 0 : i32
    return %c0_i32, %c0_i32_0 : i32, i32
  }
  func.func @transform_2(%arg0: i32) -> (i32, i32) {
    %c0_i32 = arith.constant 0 : i32
    %c0_i32_0 = arith.constant 0 : i32
    return %c0_i32, %arg0 : i32, i32
  }
}

</mosaic_0001>

<llo_original>
// kernel: tpu_custom_call.1
$region0: #{tpu_custom_call.1}
  #allocation0 [shape = 'u32[]', space=smem, size = 0x4, offset = 0x4, fixed_abs, tag = 'smem constant byte address 0x4 - core index']
  #allocation1 [shape = 'u32[144,128]{1,0:T(1,128)}', space=vmem, size = 0x12000, scoped, tag = 'internal scratch']
  %s0 = inlined_call_operand.hbm [shape: f32[7,8], index: 0, kind: input, shape index: {}]
  %s1 = inlined_call_operand.hbm [shape: f32[11,10], index: 1, kind: input, shape index: {}]
  %s2 = inlined_call_operand.vmem [shape: f32[11,8], index: 2, kind: output, shape index: {}]
  %s3 = sld [smem:[#allocation0]]
  $region26: #{tpu_custom_call.1} parent=0
    _
  %s5 = ssub.s32 1, %s3
  %s6 = scalar_select 0, %s5, %s3
  $region1: #{tpu_custom_call.1} parent=0
    #allocation2 [shape = 'u8[4096]{0}', space=vmem, size = 0x1000, scoped, tag = 'input window, operand 0, single buffered']
    #allocation3 [shape = 's32[1]{0}', space=sflag, size = 0x4, scoped, tag = 'scoped memory for tpu_custom_call.1']
    #allocation4 [shape = 'u8[8192]{0}', space=vmem, size = 0x2000, scoped, tag = 'input window, operand 1, single buffered']
    #allocation5 [shape = 's32[1]{0}', space=sflag, size = 0x4, scoped, tag = 'scoped memory for tpu_custom_call.1']
    %7 = vsyncpa [#allocation3], 0
    %8 = vsyncpa [#allocation5], 0
    // Predicated region
    $region2: #{tpu_custom_call.1} parent=1 // pred_check
      _
    $region3: #{tpu_custom_call.1} parent=1 // pred_check_branch
      %10 = sbr.rel (0) target = $region5
    $region4: #{tpu_custom_call.1} parent=1 // pred_region
      %s12 = ssub.s32 128, 128
      %13 = vsyncadd [#allocation3], %s12
      %s15 = sshll.u32 [#allocation2], 4
      %s16 = int_to_ptr.vmem [resolvable:$true] %s15
      %18 = dma.hbm_to_vmem [thread:$0]  %s0, 128, %s16, [#allocation3]
    $region5: #{tpu_custom_call.1} parent=1 // pred_fallthru
      _
    // Predicated region
    $region6: #{tpu_custom_call.1} parent=1 // pred_check
      _
    $region7: #{tpu_custom_call.1} parent=1 // pred_check_branch
      %20 = sbr.rel (0) target = $region9
    $region8: #{tpu_custom_call.1} parent=1 // pred_region
      %s22 = ssub.s32 256, 256
      %23 = vsyncadd [#allocation5], %s22
      %s24 = sshll.u32 [#allocation4], 4
      %s25 = int_to_ptr.vmem [resolvable:$true] %s24
      %30 = dma.hbm_to_vmem [thread:$0]  %s1, 256, %s25, [#allocation5], 128, 128, 8
    $region9: #{tpu_custom_call.1} parent=1 // pred_fallthru
      _
    // Predicated region
    $region10: #{tpu_custom_call.1} parent=1 // pred_check
      _
    $region11: #{tpu_custom_call.1} parent=1 // pred_check_branch
      %32 = sbr.rel (0) target = $region13
    $region12: #{tpu_custom_call.1} parent=1 // pred_region
      %33 = dma.done [#allocation3], 128
    $region13: #{tpu_custom_call.1} parent=1 // pred_fallthru
      _
    // Predicated region
    $region14: #{tpu_custom_call.1} parent=1 // pred_check
      _
    $region15: #{tpu_custom_call.1} parent=1 // pred_check_branch
      %35 = sbr.rel (0) target = $region17
    $region16: #{tpu_custom_call.1} parent=1 // pred_region
      %36 = dma.done [#allocation5], 256
    $region17: #{tpu_custom_call.1} parent=1 // pred_fallthru
      _
    %v37 = vld [vmem:[#allocation2] sm:$0x7f]
    %v38 = vmul.f32 %v37, 0.9
    %v39 = vadd.f32 %v38, 0.1
    %v40 = vmax.f32 %v39, 1e-06
    %v41 = vmul.f32 %v40, 6.3661976
    %v42 = vrsqrt.pop %v41
    %v43 = vmul.f32 %v41, %v42
    %vm44 = vcmp.eq.f32.partialorder %v41, inf
    %v45 = vsel %vm44, %v41, %v43
    %vm46 = vcmp.eq.f32.partialorder %v41, 0.0
    %v47 = vand.u32 %v41, 2147483648
    %v48 = vsel %vm46, %v47, %v45
    %v49 = vmul.f32 %v48, 2.0
    %v50 = vlog2.pop %v49
    %v51 = vmul.f32 %v50, 0.6931472
    %v52 = vmul.f32 %v51, 0.507
    %v53 = vadd.f32 %v52, 2.117
    %v54 = vmul.f32 %v53, 1.442695
    %v55 = vpow.pop %v54
    %v56 = vld [vmem:[#allocation4] sm:$0xff]
    %v57 = vld [vmem:[#allocation4 + $0x8] sm:$0x7]
    %59 = vset.pattern.permute.xlu0 7
    %60 = vperm.xlu0 %59, %v56
    %v61 = vpop.permute.xlu0 %60
    %64 = vset.pattern.permute.xlu0 7
    %65 = vperm.xlu0 %64, %v57
    %v66 = vpop.permute.xlu0 %65
    %v68 = vlaneseq
    %v69 = vshrl.u32 %v68, 7
    %v70 = vsub.s32 6, %v69
    %v71 = vrot.slane %v49, %v70
    %v72 = vmul.f32 %v61, %v71
    %v73 = vmul.f32 %v66, %v71
    %vm74 = vcmask 56320
    %v75 = vsel %vm74, %v56, 0
    %v77 = vsel %vm74, %v57, 0
    %vm79 = vcmask 1046528
    %v81 = vsel %vm79, %v37, 0
    %83 = vmatprep.subr.mxu0 0.0
    %84 = vmatpush1.msra.mxu0 %v81
    %85 = vmatprep.subr.mxu0 0.0
    %86 = vmatpush1.msra.mxu0 0.0
    %87 = vmatprep.subr.mxu0 0.0
    %88 = vmatpush1.msra.mxu0 0.0
    %89 = vmatprep.subr.mxu0 0.0
    %90 = vmatpush1.msra.mxu0 0.0
    %91 = vmatprep.subr.mxu0 0.0
    %92 = vmatpush1.msra.mxu0 0.0
    %93 = vmatprep.subr.mxu0 0.0
    %94 = vmatpush1.msra.mxu0 0.0
    %95 = vmatprep.subr.mxu0 0.0
    %96 = vmatpush1.msra.mxu0 0.0
    %97 = vmatprep.subr.mxu0 0.0
    %98 = vmatpush1.msra.mxu0 0.0
    %99 = vmatprep.subr.mxu0 0.0
    %100 = vmatpush1.msra.mxu0 0.0
    %101 = vmatprep.subr.mxu0 0.0
    %102 = vmatpush1.msra.mxu0 0.0
    %103 = vmatprep.subr.mxu0 0.0
    %104 = vmatpush1.msra.mxu0 0.0
    %105 = vmatprep.subr.mxu0 0.0
    %106 = vmatpush1.msra.mxu0 0.0
    %107 = vmatprep.subr.mxu0 0.0
    %108 = vmatpush1.msra.mxu0 0.0
    %109 = vmatprep.subr.mxu0 0.0
    %110 = vmatpush1.msra.mxu0 0.0
    %111 = vmatprep.subr.mxu0 0.0
    %112 = vmatpush1.msra.mxu0 0.0
    %113 = vmatprep.subr.mxu0 0.0
    %114 = vmatpush1.msra.mxu0 0.0
    %115 = vmatprep.subr.mxu0 0.0
    %116 = vmatpush1.msra.mxu0 0.0
    %117 = vmatprep.subr.mxu0 0.0
    %118 = vmatpush1.msra.mxu0 0.0
    %119 = vmatprep.subr.mxu0 0.0
    %120 = vmatpush1.msra.mxu0 0.0
    %121 = vmatprep.subr.mxu0 0.0
    %122 = vmatpush1.msra.mxu0 0.0
    %123 = vmatprep.subr.mxu0 0.0
    %124 = vmatpush1.msra.mxu0 0.0
    %125 = vmatprep.subr.mxu0 0.0
    %126 = vmatpush1.msra.mxu0 0.0
    %127 = vmatprep.subr.mxu0 0.0
    %128 = vmatpush1.msra.mxu0 0.0
    %129 = vmatprep.subr.mxu0 0.0
    %130 = vmatpush1.msra.mxu0 0.0
    %131 = vmatprep.subr.mxu0 0.0
    %132 = vmatpush1.msra.mxu0 0.0
    %133 = vmatprep.subr.mxu0 0.0
    %134 = vmatpush1.msra.mxu0 0.0
    %135 = vmatprep.subr.mxu0 0.0
    %136 = vmatpush1.msra.mxu0 0.0
    %137 = vmatprep.subr.mxu0 0.0
    %138 = vmatpush1.msra.mxu0 0.0
    %139 = vmatprep.subr.mxu0 0.0
    %140 = vmatpush1.msra.mxu0 0.0
    %141 = vmatprep.subr.mxu0 0.0
    %142 = vmatpush1.msra.mxu0 0.0
    %143 = vmatprep.subr.mxu0 0.0
    %144 = vmatpush1.msra.mxu0 0.0
    %145 = vmatprep.subr.mxu0 0.0
    %146 = vmatpush1.msra.mxu0 0.0
    %147 = vmatprep.mubr.f32.mxu0 0.0
    %148 = vmatmul.mubr.f32.gmra.mrb[0].mxu0 %v75
    %v149 = vpop.f32.mrb[0].mxu0
    %v150 = vadd.f32 %v72, %v149
    %v151 = vpop.f32.mrb[0].mxu0
    %152 = vmatprep.mubr.f32.mxu0 0.0
    %153 = vmatmul.mubr.f32.gmra.mrb[0].mxu0 %v77
    %v154 = vpop.f32.mrb[0].mxu0
    %v155 = vadd.f32 %v73, %v154
    %v156 = vpop.f32.mrb[0].mxu0
    %157 = vdwg.mxu0
    %158 = vset.pattern.permute.xlu0 8
    %159 = vperm.xlu0 %158, %v56
    %v160 = vpop.permute.xlu0 %159
    %162 = vset.pattern.permute.xlu0 8
    %163 = vperm.xlu0 %162, %v57
    %v164 = vpop.permute.xlu0 %163
    %v166 = vlaneseq
    %v167 = vshrl.u32 %v166, 7
    %v168 = vsub.s32 6, %v167
    %v169 = vrot.slane %v55, %v168
    %v170 = vmul.f32 %v160, %v169
    %v171 = vmul.f32 %v164, %v169
    %v172 = vadd.f32 %v150, %v170
    %v173 = vadd.f32 %v155, %v171
    %174 = vset.pattern.permute.xlu0 9
    %175 = vperm.xlu0 %174, %v56
    %v176 = vpop.permute.xlu0 %175
    %178 = vset.pattern.permute.xlu0 9
    %179 = vperm.xlu0 %178, %v57
    %v180 = vpop.permute.xlu0 %179
    %v182 = vadd.f32 %v172, %v176
    %v183 = vadd.f32 %v173, %v180
    %184 = vst [vmem:[%s2] sm:$0xff] %v182
    %185 = vst [vmem:[%s2 + $0x8] sm:$0x7] %v183
    // Predicated region
    $region18: #{tpu_custom_call.1} parent=1 // pred_check
      _
    $region19: #{tpu_custom_call.1} parent=1 // pred_check_branch
      %187 = sbr.rel (0) target = $region21
    $region20: #{tpu_custom_call.1} parent=1 // pred_region
      _
    $region21: #{tpu_custom_call.1} parent=1 // pred_fallthru
      _
    // Predicated region
    $region22: #{tpu_custom_call.1} parent=1 // pred_check
      _
    $region23: #{tpu_custom_call.1} parent=1 // pred_check_branch
      %189 = sbr.rel (0) target = $region25
    $region24: #{tpu_custom_call.1} parent=1 // pred_region
      _
    $region25: #{tpu_custom_call.1} parent=1 // pred_fallthru
      _
    %190 = vsyncpa [#allocation3], 1
    %191 = vsyncpa [#allocation5], 1

</llo_original>
